<compile_context>
chip_gen: v6e
topology: v6e:2x2x1
jax: 0.10.0
libtpu: 0.0.40
codegen_flags: <defaults>
</compile_context>

<pallas_src>
import jax
import jax.numpy as jnp
from jax.experimental import pallas as pl
from jax.experimental.pallas import tpu as pltpu

D_IN = 48
D_HID = 16
PACK = 8                        # batch rows packed per super-row -> widths 384 / 128 / 384
ROW_ALIGN = PACK * 8            # 64: keeps the packed sublane dim a multiple of 8
DEFAULT_TILE_ROWS = 16384       # tr = 2048 packed rows: ~3 MiB per f32 buffer per step


def mlp_kernel(x_ref, w1_ref, b1_ref, w2_ref, b2_ref, o_ref):
    # x_ref : (TR, 384)  packed f32 input (8 batch rows per packed row)
    # w1_ref: (384, 128) = kron(I_8, W1^T)  in compute dtype (bf16 by default)
    # b1_ref: (1, 128)   = tile(b1, 8)      f32
    # w2_ref: (128, 384) = kron(I_8, W2^T)  compute dtype
    # b2_ref: (1, 384)   = tile(b2, 8)      f32
    # o_ref : (TR, 384)  packed output
    x = x_ref[...]
    # bf16 multiply, f32 accumulate -> stays HBM-bound despite 8x block-diag inflation.
    h = jnp.dot(x.astype(w1_ref.dtype), w1_ref[...],
                preferred_element_type=jnp.float32) + b1_ref[...]
    h = jnp.maximum(h, 0.0)                                   # ReLU (f32)
    y = jnp.dot(h.astype(w2_ref.dtype), w2_ref[...],
                preferred_element_type=jnp.float32) + b2_ref[...]
    o_ref[...] = y.astype(o_ref.dtype)


def prepare_params(w1, b1, w2, b2, *, compute_dtype=jnp.bfloat16):
    """Build the block-diagonal / tiled parameter forms once (reuse across calls).

    w1: [16, 48], b1: [16], w2: [48, 16], b2: [48]  (PyTorch nn.Linear [out, in])."""
    eye = jnp.eye(PACK, dtype=jnp.float32)
    w1b = jnp.kron(eye, w1.T.astype(jnp.float32)).astype(compute_dtype)   # (384, 128)
    w2b = jnp.kron(eye, w2.T.astype(jnp.float32)).astype(compute_dtype)   # (128, 384)
    b1b = jnp.tile(b1.astype(jnp.float32), PACK).reshape(1, PACK * D_HID)  # (1, 128)
    b2b = jnp.tile(b2.astype(jnp.float32), PACK).reshape(1, PACK * D_IN)   # (1, 384)
    return w1b, b1b, w2b, b2b


def _choose_tile_rows(b_pad, tile_rows):
    # Round the requested tile down to a multiple of ROW_ALIGN, clamp to the batch.
    tile_rows = max(ROW_ALIGN, (int(tile_rows) // ROW_ALIGN) * ROW_ALIGN)
    tile_rows = min(tile_rows, b_pad)
    # Prefer >= 2 grid steps whenever possible (v7x dual-TC sharding, pipelining).
    if b_pad >= 2 * ROW_ALIGN and tile_rows > b_pad // 2:
        tile_rows = max(ROW_ALIGN, ((b_pad // 2) // ROW_ALIGN) * ROW_ALIGN)
    return tile_rows


def mlp_forward_prepared(x, prepared, *, tile_rows=DEFAULT_TILE_ROWS):
    """x: [B, 48] float32; prepared = prepare_params(...). Returns [B, 48] float32."""
    w1b, b1b, w2b, b2b = prepared
    B, d_in = x.shape
    assert d_in == D_IN, f"expected {D_IN} input features, got {d_in}"

    # Pad only to ROW_ALIGN (<= 63 extra rows), never to a tile multiple.
    b_pad = pl.cdiv(B, ROW_ALIGN) * ROW_ALIGN
    if b_pad != B:
        x = jnp.pad(x, ((0, b_pad - B), (0, 0)))

    tile_rows = _choose_tile_rows(b_pad, tile_rows)

    rows_packed = b_pad // PACK                 # packed super-rows (multiple of 8)
    tr = tile_rows // PACK                      # packed rows per grid step (multiple of 8)
    xp = x.reshape(rows_packed, PACK * D_IN)    # (R, 384) contiguous reshape, lane-dense

    grid = (pl.cdiv(rows_packed, tr),)          # ragged last block handled by Pallas

    # Honest advisory cost: block-diag MXU work is 8x the logical 2*B*48*16*2 flops.
    itemsize = jnp.dtype(x.dtype).itemsize
    w_bytes = (w1b.size + w2b.size) * jnp.dtype(w1b.dtype).itemsize
    b_bytes = (b1b.size + b2b.size) * 4
    cost = pl.CostEstimate(
        flops=2 * 2 * b_pad * D_IN * D_HID * PACK,
        transcendentals=0,
        bytes_accessed=2 * b_pad * D_IN * itemsize + w_bytes + b_bytes,
    )

    out_packed = pl.pallas_call(
        mlp_kernel,
        out_shape=jax.ShapeDtypeStruct((rows_packed, PACK * D_IN), x.dtype),
        grid_spec=pltpu.PrefetchScalarGridSpec(
            num_scalar_prefetch=0,
            grid=grid,
            in_specs=[
                pl.BlockSpec((tr, PACK * D_IN), lambda i: (i, 0)),            # x tile
                pl.BlockSpec((PACK * D_IN, PACK * D_HID), lambda i: (0, 0)),  # W1 blkdiag (resident)
                pl.BlockSpec((1, PACK * D_HID), lambda i: (0, 0)),            # b1
                pl.BlockSpec((PACK * D_HID, PACK * D_IN), lambda i: (0, 0)),  # W2 blkdiag (resident)
                pl.BlockSpec((1, PACK * D_IN), lambda i: (0, 0)),             # b2
            ],
            out_specs=pl.BlockSpec((tr, PACK * D_IN), lambda i: (i, 0)),      # lane-dense output
        ),
        compiler_params=pltpu.CompilerParams(
            dimension_semantics=("parallel",),     # grid axis shards across v7x's 2 TCs
            vmem_limit_bytes=48 * 1024 * 1024,     # fits v7x's 64 MiB; covers big tiles on v5e
        ),
        cost_estimate=cost,
    )(xp, w1b, b1b, w2b, b2b)

    out = out_packed.reshape(b_pad, D_IN)
    if b_pad != B:
        out = out[:B]
    return out


def mlp_forward(x, w1, b1, w2, b2, *, tile_rows=DEFAULT_TILE_ROWS,
                compute_dtype=jnp.bfloat16):
    """Convenience wrapper: prepares blocked params then runs the kernel."""
    prepared = prepare_params(w1, b1, w2, b2, compute_dtype=compute_dtype)
    return mlp_forward_prepared(x, prepared, tile_rows=tile_rows)


def _init_params(key):
    # Deterministic init mimicking PyTorch nn.Linear default (uniform +/- 1/sqrt(fan_in)).
    k1, k2, k3, k4 = jax.random.split(key, 4)
    bound1 = 1.0 / jnp.sqrt(48.0)
    bound2 = 1.0 / jnp.sqrt(16.0)
    w1 = jax.random.uniform(k1, (16, 48), jnp.float32, -bound1, bound1)  # [out, in]
    b1 = jax.random.uniform(k2, (16,), jnp.float32, -bound1, bound1)
    w2 = jax.random.uniform(k3, (48, 16), jnp.float32, -bound2, bound2)  # [out, in]
    b2 = jax.random.uniform(k4, (48,), jnp.float32, -bound2, bound2)
    return w1, b1, w2, b2


def _reference(x, w1, b1, w2, b2):
    return jnp.maximum(x @ w1.T + b1, 0.0) @ w2.T + b2


if __name__ == "__main__":
    key = jax.random.PRNGKey(0)
    kx1, kx2, kx3, kp = jax.random.split(key, 4)
    w1, b1, w2, b2 = _init_params(kp)

    # Blocked weights prepared once and reused across calls.
    prepared = prepare_params(w1, b1, w2, b2, compute_dtype=jnp.bfloat16)

    # bf16 GEMM operands with f32 accumulate -> ~1e-2-level relative difference vs f32.
    TOL = dict(atol=3e-2, rtol=3e-2)

    # Case 1: small aligned batch (single grid step).
    x1 = jax.random.normal(kx1, (8, 48), dtype=jnp.float32)
    out1 = jax.block_until_ready(mlp_forward_prepared(x1, prepared))
    ref1 = _reference(x1, w1, b1, w2, b2)
    assert out1.shape == (8, 48)
    assert jnp.allclose(out1, ref1, **TOL)

    # Case 2: ragged batch (pad-to-64 path) with the default tile sizing.
    x2 = jax.random.normal(kx2, (100, 48), dtype=jnp.float32)
    out2 = jax.block_until_ready(mlp_forward_prepared(x2, prepared))
    ref2 = _reference(x2, w1, b1, w2, b2)
    assert out2.shape == (100, 48)
    assert jnp.allclose(out2, ref2, **TOL)

    # Case 3: multi-step grid with a ragged last block (cdiv grid, no tile-multiple pad).
    x3 = jax.random.normal(kx3, (600, 48), dtype=jnp.float32)
    out3 = jax.block_until_ready(mlp_forward_prepared(x3, prepared, tile_rows=256))
    ref3 = _reference(x3, w1, b1, w2, b2)
    assert out3.shape == (600, 48)
    assert jnp.allclose(out3, ref3, **TOL)

    print("KERNEL_OK")
</pallas_src>

<mosaic_0001>
module attributes {stable_mosaic.version = 11 : i64} {
  func.func @mlp_kernel(%arg0: i32, %arg1: memref<8x384xf32, #tpu.memory_space<vmem>>, %arg2: memref<384x128xbf16, #tpu.memory_space<vmem>>, %arg3: memref<1x128xf32, #tpu.memory_space<vmem>>, %arg4: memref<128x384xbf16, #tpu.memory_space<vmem>>, %arg5: memref<1x384xf32, #tpu.memory_space<vmem>>, %arg6: memref<8x384xf32, #tpu.memory_space<vmem>>) attributes {dimension_semantics = [#tpu.dimension_semantics<parallel>], iteration_bounds = array<i64: 1>, scalar_prefetch = 0 : i64, scratch_operands = 0 : i64, tpu.core_type = #tpu.core_type<tc>, window_params = [{transform_indices = @transform_0, window_bounds = array<i64: 8, 384>}, {pipeline_mode = #tpu.pipeline_mode<synchronous>, transform_indices = @transform_1, window_bounds = array<i64: 384, 128>}, {pipeline_mode = #tpu.pipeline_mode<synchronous>, transform_indices = @transform_2, window_bounds = array<i64: 1, 128>}, {pipeline_mode = #tpu.pipeline_mode<synchronous>, transform_indices = @transform_3, window_bounds = array<i64: 128, 384>}, {pipeline_mode = #tpu.pipeline_mode<synchronous>, transform_indices = @transform_4, window_bounds = array<i64: 1, 384>}, {transform_indices = @transform_5, window_bounds = array<i64: 8, 384>}]} {
    %c0 = arith.constant 0 : index
    %c0_0 = arith.constant 0 : index
    %0 = vector.load %arg1[%c0, %c0_0] : memref<8x384xf32, #tpu.memory_space<vmem>>, vector<8x384xf32>
    %1 = arith.truncf %0 : vector<8x384xf32> to vector<8x384xbf16>
    %c0_1 = arith.constant 0 : index
    %c0_2 = arith.constant 0 : index
    %2 = vector.load %arg2[%c0_1, %c0_2] : memref<384x128xbf16, #tpu.memory_space<vmem>>, vector<384x128xbf16>
    %cst = arith.constant dense<0.000000e+00> : vector<8x128xf32>
    %3 = tpu.matmul %1, %2, %cst {dimension_numbers = #tpu.dot_dimension_numbers<[1], [0], [0], [1], [0, 0, 1, 1], [], []>} : vector<8x384xbf16>, vector<384x128xbf16>, vector<8x128xf32> -> vector<8x128xf32>
    %c0_3 = arith.constant 0 : index
    %c0_4 = arith.constant 0 : index
    %4 = vector.load %arg3[%c0_3, %c0_4] : memref<1x128xf32, #tpu.memory_space<vmem>>, vector<1x128xf32>
    %5 = vector.broadcast %4 : vector<1x128xf32> to vector<8x128xf32>
    %6 = arith.addf %3, %5 : vector<8x128xf32>
    %cst_5 = arith.constant 0.000000e+00 : f32
    %7 = vector.broadcast %cst_5 : f32 to vector<8x128xf32>
    %8 = arith.maximumf %6, %7 : vector<8x128xf32>
    %9 = arith.truncf %8 : vector<8x128xf32> to vector<8x128xbf16>
    %c0_6 = arith.constant 0 : index
    %c0_7 = arith.constant 0 : index
    %10 = vector.load %arg4[%c0_6, %c0_7] : memref<128x384xbf16, #tpu.memory_space<vmem>>, vector<128x384xbf16>
    %cst_8 = arith.constant dense<0.000000e+00> : vector<8x384xf32>
    %11 = tpu.matmul %9, %10, %cst_8 {dimension_numbers = #tpu.dot_dimension_numbers<[1], [0], [0], [1], [0, 0, 1, 1], [], []>} : vector<8x128xbf16>, vector<128x384xbf16>, vector<8x384xf32> -> vector<8x384xf32>
    %c0_9 = arith.constant 0 : index
    %c0_10 = arith.constant 0 : index
    %12 = vector.load %arg5[%c0_9, %c0_10] : memref<1x384xf32, #tpu.memory_space<vmem>>, vector<1x384xf32>
    %13 = vector.broadcast %12 : vector<1x384xf32> to vector<8x384xf32>
    %14 = arith.addf %11, %13 : vector<8x384xf32>
    %c0_11 = arith.constant 0 : index
    %c0_12 = arith.constant 0 : index
    %15 = vector.load %arg6[%c0_11, %c0_12] : memref<8x384xf32, #tpu.memory_space<vmem>>, vector<8x384xf32>
    tpu.vector_store %arg6[%c0_11, %c0_12], %14 {strides = array<i32>} : memref<8x384xf32, #tpu.memory_space<vmem>>, vector<8x384xf32>,
    return
  }
  func.func @transform_0(%arg0: i32) -> (i32, i32) {
    %c0_i32 = arith.constant 0 : i32
    %c0_i32_0 = arith.constant 0 : i32
    return %arg0, %c0_i32 : i32, i32
  }
  func.func @transform_1(%arg0: i32) -> (i32, i32) {
    %c0_i32 = arith.constant 0 : i32
    %c0_i32_0 = arith.constant 0 : i32
    %c0_i32_1 = arith.constant 0 : i32
    return %c0_i32, %c0_i32_0 : i32, i32
  }
  func.func @transform_2(%arg0: i32) -> (i32, i32) {
    %c0_i32 = arith.constant 0 : i32
    %c0_i32_0 = arith.constant 0 : i32
    %c0_i32_1 = arith.constant 0 : i32
    return %c0_i32, %c0_i32_0 : i32, i32
  }
  func.func @transform_3(%arg0: i32) -> (i32, i32) {
    %c0_i32 = arith.constant 0 : i32
    %c0_i32_0 = arith.constant 0 : i32
    %c0_i32_1 = arith.constant 0 : i32
    return %c0_i32, %c0_i32_0 : i32, i32
  }
  func.func @transform_4(%arg0: i32) -> (i32, i32) {
    %c0_i32 = arith.constant 0 : i32
    %c0_i32_0 = arith.constant 0 : i32
    %c0_i32_1 = arith.constant 0 : i32
    return %c0_i32, %c0_i32_0 : i32, i32
  }
  func.func @transform_5(%arg0: i32) -> (i32, i32) {
    %c0_i32 = arith.constant 0 : i32
    %c0_i32_0 = arith.constant 0 : i32
    return %arg0, %c0_i32 : i32, i32
  }
}

</mosaic_0001>

<llo_original>
// kernel: tpu_custom_call.1
$region0: #{tpu_custom_call.1}
  #allocation0 [shape = 'u32[]', space=smem, size = 0x4, offset = 0x4, fixed_abs, tag = 'smem constant byte address 0x4 - core index']
  #allocation1 [shape = 'u32[144,128]{1,0:T(1,128)}', space=vmem, size = 0x12000, scoped, tag = 'internal scratch']
  %s0 = inlined_call_operand.hbm [shape: f32[8,384], index: 0, kind: input, shape index: {}]
  %s1 = inlined_call_operand.hbm [shape: bf16[384,128], index: 1, kind: input, shape index: {}]
  %s2 = inlined_call_operand.vmem [shape: f32[1,128], index: 2, kind: input, shape index: {}]
  %s3 = inlined_call_operand.hbm [shape: bf16[128,384], index: 3, kind: input, shape index: {}]
  %s4 = inlined_call_operand.vmem [shape: f32[1,384], index: 4, kind: input, shape index: {}]
  %s5 = inlined_call_operand.hbm [shape: f32[8,384], index: 5, kind: output, shape index: {}]
  %s6 = sld [smem:[#allocation0]]
  $region42: #{tpu_custom_call.1} parent=0
    _
  %s8 = ssub.s32 1, %s6
  %s9 = scalar_select 0, %s8, %s6
  $region1: #{tpu_custom_call.1} parent=0
    #allocation2 [shape = 'u8[12288]{0}', space=vmem, size = 0x3000, scoped, tag = 'input window, operand 0, single buffered']
    #allocation3 [shape = 's32[1]{0}', space=sflag, size = 0x4, scoped, tag = 'scoped memory for tpu_custom_call.1']
    #allocation4 [shape = 's32[1]{0}', space=sflag, size = 0x4, scoped, tag = 'scoped memory for tpu_custom_call.1']
    #allocation5 [shape = 'u8[98304]{0}', space=vmem, size = 0x18000, scoped, tag = 'input window, operand 1, single buffered']
    #allocation6 [shape = 's32[1]{0}', space=sflag, size = 0x4, scoped, tag = 'scoped memory for tpu_custom_call.1']
    #allocation7 [shape = 'u8[98304]{0}', space=vmem, size = 0x18000, scoped, tag = 'input window, operand 3, single buffered']
    #allocation8 [shape = 'u8[12288]{0}', space=vmem, size = 0x3000, scoped, tag = 'output window, operand 0, single buffered']
    %10 = vsyncpa [#allocation3], 0
    %11 = vsyncpa [#allocation6], 0
    %12 = vsyncpa [#allocation4], 0
    // Predicated region
    $region2: #{tpu_custom_call.1} parent=1 // pred_check
      _
    $region3: #{tpu_custom_call.1} parent=1 // pred_check_branch
      %14 = sbr.rel (0) target = $region5
    $region4: #{tpu_custom_call.1} parent=1 // pred_region
      %s16 = ssub.s32 384, 384
      %17 = vsyncadd [#allocation3], %s16
      %s19 = sshll.u32 [#allocation2], 4
      %s20 = int_to_ptr.vmem [resolvable:$true] %s19
      %22 = dma.hbm_to_vmem [thread:$0]  %s0, 384, %s20, [#allocation3]
    $region5: #{tpu_custom_call.1} parent=1 // pred_fallthru
      _
    // Predicated region
    $region6: #{tpu_custom_call.1} parent=1 // pred_check
      _
    $region7: #{tpu_custom_call.1} parent=1 // pred_check_branch
      %24 = sbr.rel (0) target = $region9
    $region8: #{tpu_custom_call.1} parent=1 // pred_region
      %s26 = ssub.s32 3072, 3072
      %27 = vsyncadd [#allocation6], %s26
      %s28 = sshll.u32 [#allocation5], 4
      %s29 = int_to_ptr.vmem [resolvable:$true] %s28
      %34 = dma.hbm_to_vmem [thread:$0]  %s1, 3072, %s29, [#allocation6], 64, 64, 4
    $region9: #{tpu_custom_call.1} parent=1 // pred_fallthru
      _
    // Predicated region
    $region10: #{tpu_custom_call.1} parent=1 // pred_check
      _
    $region11: #{tpu_custom_call.1} parent=1 // pred_check_branch
      %36 = sbr.rel (0) target = $region13
    $region12: #{tpu_custom_call.1} parent=1 // pred_region
      _
    $region13: #{tpu_custom_call.1} parent=1 // pred_fallthru
      _
    // Predicated region
    $region14: #{tpu_custom_call.1} parent=1 // pred_check
      _
    $region15: #{tpu_custom_call.1} parent=1 // pred_check_branch
      %38 = sbr.rel (0) target = $region17
    $region16: #{tpu_custom_call.1} parent=1 // pred_region
      %s40 = ssub.s32 3072, 3072
      %41 = vsyncadd [#allocation6], %s40
      %s42 = sshll.u32 [#allocation7], 4
      %s43 = int_to_ptr.vmem [resolvable:$true] %s42
      %48 = dma.hbm_to_vmem [thread:$0]  %s3, 3072, %s43, [#allocation6], 192, 192, 12
    $region17: #{tpu_custom_call.1} parent=1 // pred_fallthru
      _
    // Predicated region
    $region18: #{tpu_custom_call.1} parent=1 // pred_check
      _
    $region19: #{tpu_custom_call.1} parent=1 // pred_check_branch
      %50 = sbr.rel (0) target = $region21
    $region20: #{tpu_custom_call.1} parent=1 // pred_region
      _
    $region21: #{tpu_custom_call.1} parent=1 // pred_fallthru
      _
    // Predicated region
    $region22: #{tpu_custom_call.1} parent=1 // pred_check
      _
    $region23: #{tpu_custom_call.1} parent=1 // pred_check_branch
      %52 = sbr.rel (0) target = $region25
    $region24: #{tpu_custom_call.1} parent=1 // pred_region
      %53 = dma.done [#allocation3], 384
    $region25: #{tpu_custom_call.1} parent=1 // pred_fallthru
      _
    // Predicated region
    $region26: #{tpu_custom_call.1} parent=1 // pred_check
      _
    $region27: #{tpu_custom_call.1} parent=1 // pred_check_branch
      %55 = sbr.rel (0) target = $region29
    $region28: #{tpu_custom_call.1} parent=1 // pred_region
      %56 = dma.done [#allocation6], 3072
    $region29: #{tpu_custom_call.1} parent=1 // pred_fallthru
      _
    // Predicated region
    $region30: #{tpu_custom_call.1} parent=1 // pred_check
      _
    $region31: #{tpu_custom_call.1} parent=1 // pred_check_branch
      %58 = sbr.rel (0) target = $region33
    $region32: #{tpu_custom_call.1} parent=1 // pred_region
      %59 = dma.done [#allocation6], 3072
    $region33: #{tpu_custom_call.1} parent=1 // pred_fallthru
      _
    %v61 = vld [vmem:[#allocation2] sm:$0xff]
    %v62 = vld [vmem:[#allocation2 + $0x8] sm:$0xff]
    %v63 = vld [vmem:[#allocation2 + $0x10] sm:$0xff]
    %v64 = vpack.c.bf16 %v61, %v61
    %v65 = vpack.c.bf16 %v62, %v62
    %v66 = vpack.c.bf16 %v63, %v63
    %v67 = vld [vmem:[#allocation5] sm:$0xf]
    %v68 = vld [vmem:[#allocation5 + $0x4] sm:$0xf]
    %v69 = vld [vmem:[#allocation5 + $0x8] sm:$0xf]
    %v70 = vld [vmem:[#allocation5 + $0xc] sm:$0xf]
    %v71 = vld [vmem:[#allocation5 + $0x10] sm:$0xf]
    %v72 = vld [vmem:[#allocation5 + $0x14] sm:$0xf]
    %v73 = vld [vmem:[#allocation5 + $0x18] sm:$0xf]
    %v74 = vld [vmem:[#allocation5 + $0x1c] sm:$0xf]
    %v75 = vld [vmem:[#allocation5 + $0x20] sm:$0xf]
    %v76 = vld [vmem:[#allocation5 + $0x24] sm:$0xf]
    %v77 = vld [vmem:[#allocation5 + $0x28] sm:$0xf]
    %v78 = vld [vmem:[#allocation5 + $0x2c] sm:$0xf]
    %v79 = vld [vmem:[#allocation5 + $0x30] sm:$0xf]
    %v80 = vld [vmem:[#allocation5 + $0x34] sm:$0xf]
    %v81 = vld [vmem:[#allocation5 + $0x38] sm:$0xf]
    %v82 = vld [vmem:[#allocation5 + $0x3c] sm:$0xf]
    %v83 = vld [vmem:[#allocation5 + $0x40] sm:$0xf]
    %v84 = vld [vmem:[#allocation5 + $0x44] sm:$0xf]
    %v85 = vld [vmem:[#allocation5 + $0x48] sm:$0xf]
    %v86 = vld [vmem:[#allocation5 + $0x4c] sm:$0xf]
    %v87 = vld [vmem:[#allocation5 + $0x50] sm:$0xf]
    %v88 = vld [vmem:[#allocation5 + $0x54] sm:$0xf]
    %v89 = vld [vmem:[#allocation5 + $0x58] sm:$0xf]
    %v90 = vld [vmem:[#allocation5 + $0x5c] sm:$0xf]
    %v91 = vld [vmem:[#allocation5 + $0x60] sm:$0xf]
    %v92 = vld [vmem:[#allocation5 + $0x64] sm:$0xf]
    %v93 = vld [vmem:[#allocation5 + $0x68] sm:$0xf]
    %v94 = vld [vmem:[#allocation5 + $0x6c] sm:$0xf]
    %v95 = vld [vmem:[#allocation5 + $0x70] sm:$0xf]
    %v96 = vld [vmem:[#allocation5 + $0x74] sm:$0xf]
    %v97 = vld [vmem:[#allocation5 + $0x78] sm:$0xf]
    %v98 = vld [vmem:[#allocation5 + $0x7c] sm:$0xf]
    %v99 = vld [vmem:[#allocation5 + $0x80] sm:$0xf]
    %v100 = vld [vmem:[#allocation5 + $0x84] sm:$0xf]
    %v101 = vld [vmem:[#allocation5 + $0x88] sm:$0xf]
    %v102 = vld [vmem:[#allocation5 + $0x8c] sm:$0xf]
    %v103 = vld [vmem:[#allocation5 + $0x90] sm:$0xf]
    %v104 = vld [vmem:[#allocation5 + $0x94] sm:$0xf]
    %v105 = vld [vmem:[#allocation5 + $0x98] sm:$0xf]
    %v106 = vld [vmem:[#allocation5 + $0x9c] sm:$0xf]
    %v107 = vld [vmem:[#allocation5 + $0xa0] sm:$0xf]
    %v108 = vld [vmem:[#allocation5 + $0xa4] sm:$0xf]
    %v109 = vld [vmem:[#allocation5 + $0xa8] sm:$0xf]
    %v110 = vld [vmem:[#allocation5 + $0xac] sm:$0xf]
    %v111 = vld [vmem:[#allocation5 + $0xb0] sm:$0xf]
    %v112 = vld [vmem:[#allocation5 + $0xb4] sm:$0xf]
    %v113 = vld [vmem:[#allocation5 + $0xb8] sm:$0xf]
    %v114 = vld [vmem:[#allocation5 + $0xbc] sm:$0xf]
    %v115 = vld [vmem:[%s2] sm:$0x1]
    %v117 = vlaneseq
    %v118 = vshrl.u32 %v117, 7
    %v119 = vsub.s32 0, %v118
    %v120 = vrot.slane %v115, %v119
    %v170 = vunpack.c.l.b16 %v67
    %v171 = vunpack.c.l.b16 %v68
    %v172 = vunpack.c.l.b16 %v69
    %v173 = vunpack.c.l.b16 %v70
    %v174 = vunpack.c.l.b16 %v71
    %v175 = vunpack.c.l.b16 %v72
    %v176 = vunpack.c.l.b16 %v73
    %v177 = vunpack.c.l.b16 %v74
    %v178 = vunpack.c.l.b16 %v75
    %v179 = vunpack.c.l.b16 %v76
    %v180 = vunpack.c.l.b16 %v77
    %v181 = vunpack.c.l.b16 %v78
    %v182 = vunpack.c.l.b16 %v79
    %v183 = vunpack.c.l.b16 %v80
    %v184 = vunpack.c.l.b16 %v81
    %v185 = vunpack.c.l.b16 %v82
    %v186 = vunpack.c.l.b16 %v83
    %v187 = vunpack.c.l.b16 %v84
    %v188 = vunpack.c.l.b16 %v85
    %v189 = vunpack.c.l.b16 %v86
    %v190 = vunpack.c.l.b16 %v87
    %v191 = vunpack.c.l.b16 %v88
    %v192 = vunpack.c.l.b16 %v89
    %v193 = vunpack.c.l.b16 %v90
    %v194 = vunpack.c.l.b16 %v91
    %v195 = vunpack.c.l.b16 %v92
    %v196 = vunpack.c.l.b16 %v93
    %v197 = vunpack.c.l.b16 %v94
    %v198 = vunpack.c.l.b16 %v95
    %v199 = vunpack.c.l.b16 %v96
    %v200 = vunpack.c.l.b16 %v97
    %v201 = vunpack.c.l.b16 %v98
    %v202 = vunpack.c.l.b16 %v99
    %v203 = vunpack.c.l.b16 %v100
    %v204 = vunpack.c.l.b16 %v101
    %v205 = vunpack.c.l.b16 %v102
    %v206 = vunpack.c.l.b16 %v103
    %v207 = vunpack.c.l.b16 %v104
    %v208 = vunpack.c.l.b16 %v105
    %v209 = vunpack.c.l.b16 %v106
    %v210 = vunpack.c.l.b16 %v107
    %v211 = vunpack.c.l.b16 %v108
    %v212 = vunpack.c.l.b16 %v109
    %v213 = vunpack.c.l.b16 %v110
    %v214 = vunpack.c.l.b16 %v111
    %v215 = vunpack.c.l.b16 %v112
    %v216 = vunpack.c.l.b16 %v113
    %v217 = vunpack.c.l.b16 %v114
    %v218 = vpack.c.b16 %v171, %v170
    %v219 = vpack.c.b16 %v173, %v172
    %v220 = vpack.c.b16 %v175, %v174
    %v221 = vpack.c.b16 %v177, %v176
    %v222 = vpack.c.b16 %v179, %v178
    %v223 = vpack.c.b16 %v181, %v180
    %v224 = vpack.c.b16 %v183, %v182
    %v225 = vpack.c.b16 %v185, %v184
    %v226 = vpack.c.b16 %v187, %v186
    %v227 = vpack.c.b16 %v189, %v188
    %v228 = vpack.c.b16 %v191, %v190
    %v229 = vpack.c.b16 %v193, %v192
    %v230 = vpack.c.b16 %v195, %v194
    %v231 = vpack.c.b16 %v197, %v196
    %v232 = vpack.c.b16 %v199, %v198
    %v233 = vpack.c.b16 %v201, %v200
    %v234 = vpack.c.b16 %v203, %v202
    %v235 = vpack.c.b16 %v205, %v204
    %v236 = vpack.c.b16 %v207, %v206
    %v237 = vpack.c.b16 %v209, %v208
    %v238 = vpack.c.b16 %v211, %v210
    %v239 = vpack.c.b16 %v213, %v212
    %v240 = vpack.c.b16 %v215, %v214
    %v241 = vpack.c.b16 %v217, %v216
    %266 = vmatprep.subr.bf16.mxu0 0
    %267 = vmatpush1.bf16.msra.mxu0 %v225
    %268 = vmatprep.subr.bf16.mxu0 0
    %269 = vmatpush1.bf16.msra.mxu0 %v224
    %270 = vmatprep.subr.bf16.mxu0 0
    %271 = vmatpush1.bf16.msra.mxu0 %v223
    %272 = vmatprep.subr.bf16.mxu0 0
    %273 = vmatpush1.bf16.msra.mxu0 %v222
    %274 = vmatprep.subr.bf16.mxu0 0
    %275 = vmatpush1.bf16.msra.mxu0 %v221
    %276 = vmatprep.subr.bf16.mxu0 0
    %277 = vmatpush1.bf16.msra.mxu0 %v220
    %278 = vmatprep.subr.bf16.mxu0 0
    %279 = vmatpush1.bf16.msra.mxu0 %v219
    %280 = vmatprep.subr.bf16.mxu0 0
    %281 = vmatpush1.bf16.msra.mxu0 %v218
    %282 = vmatprep.subr.bf16.mxu0 0
    %283 = vmatpush2.bf16.msra.mxu0 %v233
    %284 = vmatprep.subr.bf16.mxu0 0
    %285 = vmatpush2.bf16.msra.mxu0 %v232
    %286 = vmatprep.subr.bf16.mxu0 0
    %287 = vmatpush2.bf16.msra.mxu0 %v231
    %288 = vmatprep.subr.bf16.mxu0 0
    %289 = vmatpush2.bf16.msra.mxu0 %v230
    %290 = vmatprep.subr.bf16.mxu0 0
    %291 = vmatpush2.bf16.msra.mxu0 %v229
    %292 = vmatprep.subr.bf16.mxu0 0
    %293 = vmatpush2.bf16.msra.mxu0 %v228
    %294 = vmatprep.subr.bf16.mxu0 0
    %295 = vmatpush2.bf16.msra.mxu0 %v227
    %296 = vmatprep.subr.bf16.mxu0 0
    %297 = vmatpush2.bf16.msra.mxu0 %v226
    %298 = vmatprep.mubr.bf16.mxu0 %v65
    %299 = vmatmul.mubr.bf16.gmra.mxu0 %v64
    %v300 = vpop.f32.mrf.mxu0
    %v301 = vadd.f32 %v120, %v300
    %v302 = vpop.f32.mrf.mxu0
    %v303 = vpop.f32.mrf.mxu0
    %v304 = vpop.f32.mrf.mxu0
    %305 = vdwg.mxu0
    %306 = vmatprep.subr.bf16.mxu0 0
    %307 = vmatpush1.bf16.msra.mxu0 %v241
    %308 = vmatprep.subr.bf16.mxu0 0
    %309 = vmatpush1.bf16.msra.mxu0 %v240
    %310 = vmatprep.subr.bf16.mxu0 0
    %311 = vmatpush1.bf16.msra.mxu0 %v239
    %312 = vmatprep.subr.bf16.mxu0 0
    %313 = vmatpush1.bf16.msra.mxu0 %v238
    %314 = vmatprep.subr.bf16.mxu0 0
    %315 = vmatpush1.bf16.msra.mxu0 %v237
    %316 = vmatprep.subr.bf16.mxu0 0
    %317 = vmatpush1.bf16.msra.mxu0 %v236
    %318 = vmatprep.subr.bf16.mxu0 0
    %319 = vmatpush1.bf16.msra.mxu0 %v235
    %320 = vmatprep.subr.bf16.mxu0 0
    %321 = vmatpush1.bf16.msra.mxu0 %v234
    %322 = vmatprep.subr.bf16.mxu0 0
    %323 = vmatpush2.bf16.msra.mxu0 0
    %324 = vmatprep.subr.bf16.mxu0 0
    %325 = vmatpush2.bf16.msra.mxu0 0
    %326 = vmatprep.subr.bf16.mxu0 0
    %327 = vmatpush2.bf16.msra.mxu0 0
    %328 = vmatprep.subr.bf16.mxu0 0
    %329 = vmatpush2.bf16.msra.mxu0 0
    %330 = vmatprep.subr.bf16.mxu0 0
    %331 = vmatpush2.bf16.msra.mxu0 0
    %332 = vmatprep.subr.bf16.mxu0 0
    %333 = vmatpush2.bf16.msra.mxu0 0
    %334 = vmatprep.subr.bf16.mxu0 0
    %335 = vmatpush2.bf16.msra.mxu0 0
    %336 = vmatprep.subr.bf16.mxu0 0
    %337 = vmatpush2.bf16.msra.mxu0 0
    %338 = vmatprep.mubr.bf16.mxu0 0
    %339 = vmatmul.mubr.bf16.gmra.mxu0 %v66
    %v340 = vpop.f32.mrf.mxu0
    %v341 = vadd.f32 %v301, %v340
    %v342 = vpop.f32.mrf.mxu0
    %v343 = vpop.f32.mrf.mxu0
    %v344 = vpop.f32.mrf.mxu0
    %345 = vdwg.mxu0
    %v346 = vmax.f32 %v341, 0.0
    %v347 = vpack.c.bf16 %v346, %v346
    %v348 = vld [vmem:[#allocation7] sm:$0xff]
    %v349 = vld [vmem:[#allocation7 + $0x8] sm:$0xf]
    %v350 = vld [vmem:[#allocation7 + $0xc] sm:$0xff]
    %v351 = vld [vmem:[#allocation7 + $0x14] sm:$0xf]
    %v352 = vld [vmem:[#allocation7 + $0x18] sm:$0xff]
    %v353 = vld [vmem:[#allocation7 + $0x20] sm:$0xf]
    %v354 = vld [vmem:[#allocation7 + $0x24] sm:$0xff]
    %v355 = vld [vmem:[#allocation7 + $0x2c] sm:$0xf]
    %v356 = vld [vmem:[#allocation7 + $0x30] sm:$0xff]
    %v357 = vld [vmem:[#allocation7 + $0x38] sm:$0xf]
    %v358 = vld [vmem:[#allocation7 + $0x3c] sm:$0xff]
    %v359 = vld [vmem:[#allocation7 + $0x44] sm:$0xf]
    %v360 = vld [vmem:[#allocation7 + $0x48] sm:$0xff]
    %v361 = vld [vmem:[#allocation7 + $0x50] sm:$0xf]
    %v362 = vld [vmem:[#allocation7 + $0x54] sm:$0xff]
    %v363 = vld [vmem:[#allocation7 + $0x5c] sm:$0xf]
    %v364 = vld [vmem:[#allocation7 + $0x60] sm:$0xff]
    %v365 = vld [vmem:[#allocation7 + $0x68] sm:$0xf]
    %v366 = vld [vmem:[#allocation7 + $0x6c] sm:$0xff]
    %v367 = vld [vmem:[#allocation7 + $0x74] sm:$0xf]
    %v368 = vld [vmem:[#allocation7 + $0x78] sm:$0xff]
    %v369 = vld [vmem:[#allocation7 + $0x80] sm:$0xf]
    %v370 = vld [vmem:[#allocation7 + $0x84] sm:$0xff]
    %v371 = vld [vmem:[#allocation7 + $0x8c] sm:$0xf]
    %v372 = vld [vmem:[#allocation7 + $0x90] sm:$0xff]
    %v373 = vld [vmem:[#allocation7 + $0x98] sm:$0xf]
    %v374 = vld [vmem:[#allocation7 + $0x9c] sm:$0xff]
    %v375 = vld [vmem:[#allocation7 + $0xa4] sm:$0xf]
    %v376 = vld [vmem:[#allocation7 + $0xa8] sm:$0xff]
    %v377 = vld [vmem:[#allocation7 + $0xb0] sm:$0xf]
    %v378 = vld [vmem:[#allocation7 + $0xb4] sm:$0xff]
    %v379 = vld [vmem:[#allocation7 + $0xbc] sm:$0xf]
    %v380 = vld [vmem:[%s4] sm:$0x7]
    %v382 = vlaneseq
    %v383 = vshrl.u32 %v382, 7
    %v384 = vsub.s32 0, %v383
    %v385 = vrot.slane %v380, %v384
    %v386 = vlaneseq
    %v387 = vshrl.u32 %v386, 7
    %v388 = vsub.s32 1, %v387
    %v389 = vrot.slane %v380, %v388
    %v390 = vlaneseq
    %v391 = vshrl.u32 %v390, 7
    %v392 = vsub.s32 2, %v391
    %v393 = vrot.slane %v380, %v392
    %v429 = vunpack.c.l.b16 %v348
    %v430 = vunpack.c.h.b16 %v348
    %v431 = vunpack.c.l.b16 %v349
    %v432 = vunpack.c.l.b16 %v350
    %v433 = vunpack.c.h.b16 %v350
    %v434 = vunpack.c.l.b16 %v351
    %v435 = vunpack.c.l.b16 %v352
    %v436 = vunpack.c.h.b16 %v352
    %v437 = vunpack.c.l.b16 %v353
    %v438 = vunpack.c.l.b16 %v354
    %v439 = vunpack.c.h.b16 %v354
    %v440 = vunpack.c.l.b16 %v355
    %v441 = vunpack.c.l.b16 %v356
    %v442 = vunpack.c.h.b16 %v356
    %v443 = vunpack.c.l.b16 %v357
    %v444 = vunpack.c.l.b16 %v358
    %v445 = vunpack.c.h.b16 %v358
    %v446 = vunpack.c.l.b16 %v359
    %v447 = vunpack.c.l.b16 %v360
    %v448 = vunpack.c.h.b16 %v360
    %v449 = vunpack.c.l.b16 %v361
    %v450 = vunpack.c.l.b16 %v362
    %v451 = vunpack.c.h.b16 %v362
    %v452 = vunpack.c.l.b16 %v363
    %v453 = vunpack.c.l.b16 %v364
    %v454 = vunpack.c.h.b16 %v364
    %v455 = vunpack.c.l.b16 %v365
    %v456 = vunpack.c.l.b16 %v366
    %v457 = vunpack.c.h.b16 %v366
    %v458 = vunpack.c.l.b16 %v367
    %v459 = vunpack.c.l.b16 %v368
    %v460 = vunpack.c.h.b16 %v368
    %v461 = vunpack.c.l.b16 %v369
    %v462 = vunpack.c.l.b16 %v370
    %v463 = vunpack.c.h.b16 %v370
    %v464 = vunpack.c.l.b16 %v371
    %v465 = vunpack.c.l.b16 %v372
    %v466 = vunpack.c.h.b16 %v372
    %v467 = vunpack.c.l.b16 %v373
    %v468 = vunpack.c.l.b16 %v374
    %v469 = vunpack.c.h.b16 %v374
    %v470 = vunpack.c.l.b16 %v375
    %v471 = vunpack.c.l.b16 %v376
    %v472 = vunpack.c.h.b16 %v376
    %v473 = vunpack.c.l.b16 %v377
    %v474 = vunpack.c.l.b16 %v378
    %v475 = vunpack.c.h.b16 %v378
    %v476 = vunpack.c.l.b16 %v379
    %v477 = vpack.c.b16 %v432, %v429
    %v478 = vpack.c.b16 %v433, %v430
    %v479 = vpack.c.b16 %v434, %v431
    %v480 = vpack.c.b16 %v438, %v435
    %v481 = vpack.c.b16 %v439, %v436
    %v482 = vpack.c.b16 %v440, %v437
    %v483 = vpack.c.b16 %v444, %v441
    %v484 = vpack.c.b16 %v445, %v442
    %v485 = vpack.c.b16 %v446, %v443
    %v486 = vpack.c.b16 %v450, %v447
    %v487 = vpack.c.b16 %v451, %v448
    %v488 = vpack.c.b16 %v452, %v449
    %v489 = vpack.c.b16 %v456, %v453
    %v490 = vpack.c.b16 %v457, %v454
    %v491 = vpack.c.b16 %v458, %v455
    %v492 = vpack.c.b16 %v462, %v459
    %v493 = vpack.c.b16 %v463, %v460
    %v494 = vpack.c.b16 %v464, %v461
    %v495 = vpack.c.b16 %v468, %v465
    %v496 = vpack.c.b16 %v469, %v466
    %v497 = vpack.c.b16 %v470, %v467
    %v498 = vpack.c.b16 %v474, %v471
    %v499 = vpack.c.b16 %v475, %v472
    %v500 = vpack.c.b16 %v476, %v473
    %525 = vmatprep.subr.bf16.mxu0 %v499
    %526 = vmatpush1.bf16.msra.mxu0 %v498
    %527 = vmatprep.subr.bf16.mxu0 %v496
    %528 = vmatpush1.bf16.msra.mxu0 %v495
    %529 = vmatprep.subr.bf16.mxu0 %v493
    %530 = vmatpush1.bf16.msra.mxu0 %v492
    %531 = vmatprep.subr.bf16.mxu0 %v490
    %532 = vmatpush1.bf16.msra.mxu0 %v489
    %533 = vmatprep.subr.bf16.mxu0 %v487
    %534 = vmatpush1.bf16.msra.mxu0 %v486
    %535 = vmatprep.subr.bf16.mxu0 %v484
    %536 = vmatpush1.bf16.msra.mxu0 %v483
    %537 = vmatprep.subr.bf16.mxu0 %v481
    %538 = vmatpush1.bf16.msra.mxu0 %v480
    %539 = vmatprep.subr.bf16.mxu0 %v478
    %540 = vmatpush1.bf16.msra.mxu0 %v477
    %541 = vmatprep.subr.bf16.mxu0 0
    %542 = vmatpush2.bf16.msra.mxu0 0
    %543 = vmatprep.subr.bf16.mxu0 0
    %544 = vmatpush2.bf16.msra.mxu0 0
    %545 = vmatprep.subr.bf16.mxu0 0
    %546 = vmatpush2.bf16.msra.mxu0 0
    %547 = vmatprep.subr.bf16.mxu0 0
    %548 = vmatpush2.bf16.msra.mxu0 0
    %549 = vmatprep.subr.bf16.mxu0 0
    %550 = vmatpush2.bf16.msra.mxu0 0
    %551 = vmatprep.subr.bf16.mxu0 0
    %552 = vmatpush2.bf16.msra.mxu0 0
    %553 = vmatprep.subr.bf16.mxu0 0
    %554 = vmatpush2.bf16.msra.mxu0 0
    %555 = vmatprep.subr.bf16.mxu0 0
    %556 = vmatpush2.bf16.msra.mxu0 0
    %557 = vmatprep.mubr.bf16.mxu0 0
    %558 = vmatmul.mubr.bf16.gmra.mxu0 %v347
    %v559 = vpop.f32.mrf.mxu0
    %v560 = vadd.f32 %v385, %v559
    %v561 = vpop.f32.mrf.mxu0
    %v562 = vadd.f32 %v389, %v561
    %v563 = vpop.f32.mrf.mxu0
    %v564 = vpop.f32.mrf.mxu0
    %565 = vdwg.mxu0
    %566 = vmatprep.subr.bf16.mxu0 0
    %567 = vmatpush1.bf16.msra.mxu0 %v500
    %568 = vmatprep.subr.bf16.mxu0 0
    %569 = vmatpush1.bf16.msra.mxu0 %v497
    %570 = vmatprep.subr.bf16.mxu0 0
    %571 = vmatpush1.bf16.msra.mxu0 %v494
    %572 = vmatprep.subr.bf16.mxu0 0
    %573 = vmatpush1.bf16.msra.mxu0 %v491
    %574 = vmatprep.subr.bf16.mxu0 0
    %575 = vmatpush1.bf16.msra.mxu0 %v488
    %576 = vmatprep.subr.bf16.mxu0 0
    %577 = vmatpush1.bf16.msra.mxu0 %v485
    %578 = vmatprep.subr.bf16.mxu0 0
    %579 = vmatpush1.bf16.msra.mxu0 %v482
    %580 = vmatprep.subr.bf16.mxu0 0
    %581 = vmatpush1.bf16.msra.mxu0 %v479
    %582 = vmatprep.subr.bf16.mxu0 0
    %583 = vmatpush2.bf16.msra.mxu0 0
    %584 = vmatprep.subr.bf16.mxu0 0
    %585 = vmatpush2.bf16.msra.mxu0 0
    %586 = vmatprep.subr.bf16.mxu0 0
    %587 = vmatpush2.bf16.msra.mxu0 0
    %588 = vmatprep.subr.bf16.mxu0 0
    %589 = vmatpush2.bf16.msra.mxu0 0
    %590 = vmatprep.subr.bf16.mxu0 0
    %591 = vmatpush2.bf16.msra.mxu0 0
    %592 = vmatprep.subr.bf16.mxu0 0
    %593 = vmatpush2.bf16.msra.mxu0 0
    %594 = vmatprep.subr.bf16.mxu0 0
    %595 = vmatpush2.bf16.msra.mxu0 0
    %596 = vmatprep.subr.bf16.mxu0 0
    %597 = vmatpush2.bf16.msra.mxu0 0
    %598 = vmatprep.mubr.bf16.mxu0 0
    %599 = vmatmul.mubr.bf16.gmra.mxu0 %v347
    %v600 = vpop.f32.mrf.mxu0
    %v601 = vadd.f32 %v393, %v600
    %v602 = vpop.f32.mrf.mxu0
    %v603 = vpop.f32.mrf.mxu0
    %v604 = vpop.f32.mrf.mxu0
    %605 = vdwg.mxu0
    %606 = vst [vmem:[#allocation8] sm:$0xff] %v560
    %607 = vst [vmem:[#allocation8 + $0x8] sm:$0xff] %v562
    %608 = vst [vmem:[#allocation8 + $0x10] sm:$0xff] %v601
    // Predicated region
    $region34: #{tpu_custom_call.1} parent=1 // pred_check
      _
    $region35: #{tpu_custom_call.1} parent=1 // pred_check_branch
      %610 = sbr.rel (0) target = $region37
    $region36: #{tpu_custom_call.1} parent=1 // pred_region
      %s612 = ssub.s32 384, 384
      %613 = vsyncadd [#allocation4], %s612
      %s615 = sshll.u32 [#allocation8], 4
      %s616 = int_to_ptr.vmem [resolvable:$true] %s615
      %618 = dma.vmem_to_hbm [thread:$0]  %s616, 384, %s5, [#allocation4]
    $region37: #{tpu_custom_call.1} parent=1 // pred_fallthru
      _
    // Predicated region
    $region38: #{tpu_custom_call.1} parent=1 // pred_check
      _
    $region39: #{tpu_custom_call.1} parent=1 // pred_check_branch
      %620 = sbr.rel (0) target = $region41
    $region40: #{tpu_custom_call.1} parent=1 // pred_region
      %621 = dma.done [#allocation4], 384
    $region41: #{tpu_custom_call.1} parent=1 // pred_fallthru
      _
    %622 = vsyncpa [#allocation3], 1
    %623 = vsyncpa [#allocation6], 1
    %624 = vsyncpa [#allocation4], 1

</llo_original>
